<compile_context>
chip_gen: v5e
topology: v5e:2x2
jax: 0.10.0
libtpu: 0.0.40
codegen_flags: <defaults>
</compile_context>

<pallas_src>
import numpy as np
import jax
import jax.numpy as jnp
from jax.experimental import pallas as pl
from jax.experimental.pallas import tpu as pltpu

_LANES = 128
_TS_CAP = 2048            # 3 MiB f32 block at (1, 3, 2048, 128)
_SHIFT_CB_CR = 128.0 / 255.0


def _ycbcr_kernel(x_ref, o_ref):
    # x_ref / o_ref : VMEM (1, 3, TS, 128) float32
    x = x_ref[...]
    r = x[:, 0]            # (1, TS, 128) -- sublane-dense tiles
    g = x[:, 1]
    b = x[:, 2]
    # Y, Cb, Cr with constants baked in; shift pre-divided by 255.
    o_ref[:, 0] = 0.299 * r + 0.587 * g + 0.114 * b
    o_ref[:, 1] = (-0.168736) * r + (-0.331264) * g + 0.5 * b + _SHIFT_CB_CR
    o_ref[:, 2] = 0.5 * r + (-0.418688) * g + (-0.081312) * b + _SHIFT_CB_CR


def _pick_tile(s):
    """Largest sublane tile TS (multiple of 8, <= _TS_CAP); may require padding S."""
    if s <= _TS_CAP:
        return ((s + 7) // 8) * 8          # single tile along the spatial axis
    for cand in range(_TS_CAP, 0, -8):      # largest multiple-of-8 divisor of S
        if s % cand == 0 and cand >= 256:
            return cand
    return _TS_CAP                           # no good divisor -> pad S up to a cap multiple


def rgb_to_ycbcr_jpeg(image):
    """image: (B, 3, H, W) float -> (B, 3, H, W) float32 (Y, Cb, Cr)."""
    B, C, H, W = image.shape
    assert C == 3
    HW = H * W

    S = pl.cdiv(HW, _LANES)                  # sublane rows per channel
    TS = _pick_tile(S)
    S_pad = pl.cdiv(S, TS) * TS
    HW_pad = S_pad * _LANES

    x = image.reshape(B, 3, HW).astype(jnp.float32)
    if HW_pad != HW:
        x = jnp.pad(x, ((0, 0), (0, 0), (0, HW_pad - HW)))
    x = x.reshape(B, 3, S_pad, _LANES)

    out = pl.pallas_call(
        _ycbcr_kernel,
        out_shape=jax.ShapeDtypeStruct((B, 3, S_pad, _LANES), jnp.float32),
        grid=(B, S_pad // TS),
        in_specs=[pl.BlockSpec((1, 3, TS, _LANES), lambda b, t: (b, 0, t, 0))],
        out_specs=pl.BlockSpec((1, 3, TS, _LANES), lambda b, t: (b, 0, t, 0)),
        compiler_params=pltpu.CompilerParams(
            dimension_semantics=("parallel", "parallel"),
            vmem_limit_bytes=32 * 1024 * 1024,
        ),
    )(x)

    out = out.reshape(B, 3, HW_pad)
    if HW_pad != HW:
        out = out[:, :, :HW]
    return out.reshape(B, 3, H, W)


def _reference(image):
    """Pure-JAX replica of the torch forward (original op order) for verification."""
    matrix = jnp.asarray(
        np.array(
            [[0.299, 0.587, 0.114],
             [-0.168736, -0.331264, 0.5],
             [0.5, -0.418688, -0.081312]],
            dtype=np.float32,
        ).T
    )
    shift = jnp.asarray(np.array([0.0, 128.0, 128.0], dtype=np.float32))
    x = image * 255.0
    x = jnp.transpose(x, (0, 2, 3, 1))           # (B, H, W, 3)
    res = jnp.tensordot(x, matrix, axes=1) + shift
    res = res / 255.0
    return jnp.transpose(res, (0, 3, 1, 2))      # (B, 3, H, W)


if __name__ == "__main__":
    key = jax.random.PRNGKey(0)
    B, C, H, W = 2, 3, 16, 16
    image = jax.random.uniform(key, (B, C, H, W), dtype=jnp.float32)

    out = rgb_to_ycbcr_jpeg(image)
    out = jax.block_until_ready(out)

    ref = jax.block_until_ready(_reference(image))
    assert out.shape == (B, 3, H, W)
    assert out.dtype == jnp.float32
    np.testing.assert_allclose(np.asarray(out), np.asarray(ref), rtol=1e-5, atol=1e-5)

    print("KERNEL_OK")
</pallas_src>

<mosaic_0001>
module attributes {stable_mosaic.version = 11 : i64} {
  func.func @_ycbcr_kernel(%arg0: i32, %arg1: i32, %arg2: memref<1x3x8x128xf32, #tpu.memory_space<vmem>>, %arg3: memref<1x3x8x128xf32, #tpu.memory_space<vmem>>) attributes {dimension_semantics = [#tpu.dimension_semantics<parallel>, #tpu.dimension_semantics<parallel>], iteration_bounds = array<i64: 2, 1>, scalar_prefetch = 0 : i64, scratch_operands = 0 : i64, tpu.core_type = #tpu.core_type<tc>, window_params = [{transform_indices = @transform_0, window_bounds = array<i64: 1, 3, 8, 128>}, {transform_indices = @transform_1, window_bounds = array<i64: 1, 3, 8, 128>}]} {
    %c0 = arith.constant 0 : index
    %c0_0 = arith.constant 0 : index
    %c0_1 = arith.constant 0 : index
    %c0_2 = arith.constant 0 : index
    %0 = vector.load %arg2[%c0, %c0_0, %c0_1, %c0_2] : memref<1x3x8x128xf32, #tpu.memory_space<vmem>>, vector<1x3x8x128xf32>
    %1 = vector.extract_strided_slice %0 {offsets = [0, 0, 0, 0], sizes = [1, 1, 8, 128], strides = [1, 1, 1, 1]} : vector<1x3x8x128xf32> to vector<1x1x8x128xf32>
    %2 = vector.shape_cast %1 : vector<1x1x8x128xf32> to vector<1x8x128xf32>
    %3 = vector.extract_strided_slice %0 {offsets = [0, 1, 0, 0], sizes = [1, 1, 8, 128], strides = [1, 1, 1, 1]} : vector<1x3x8x128xf32> to vector<1x1x8x128xf32>
    %4 = vector.shape_cast %3 : vector<1x1x8x128xf32> to vector<1x8x128xf32>
    %5 = vector.extract_strided_slice %0 {offsets = [0, 2, 0, 0], sizes = [1, 1, 8, 128], strides = [1, 1, 1, 1]} : vector<1x3x8x128xf32> to vector<1x1x8x128xf32>
    %6 = vector.shape_cast %5 : vector<1x1x8x128xf32> to vector<1x8x128xf32>
    %cst = arith.constant 2.990000e-01 : f32
    %7 = vector.broadcast %cst : f32 to vector<1x8x128xf32>
    %8 = arith.mulf %7, %2 : vector<1x8x128xf32>
    %cst_3 = arith.constant 5.870000e-01 : f32
    %9 = vector.broadcast %cst_3 : f32 to vector<1x8x128xf32>
    %10 = arith.mulf %9, %4 : vector<1x8x128xf32>
    %11 = arith.addf %8, %10 : vector<1x8x128xf32>
    %cst_4 = arith.constant 1.140000e-01 : f32
    %12 = vector.broadcast %cst_4 : f32 to vector<1x8x128xf32>
    %13 = arith.mulf %12, %6 : vector<1x8x128xf32>
    %14 = arith.addf %11, %13 : vector<1x8x128xf32>
    %c0_5 = arith.constant 0 : index
    %c0_6 = arith.constant 0 : index
    %c0_7 = arith.constant 0 : index
    %c0_8 = arith.constant 0 : index
    %15 = vector.load %arg3[%c0_5, %c0_6, %c0_7, %c0_8] : memref<1x3x8x128xf32, #tpu.memory_space<vmem>>, vector<1x1x8x128xf32>
    %16 = vector.shape_cast %15 : vector<1x1x8x128xf32> to vector<1x8x128xf32>
    %17 = vector.shape_cast %14 : vector<1x8x128xf32> to vector<1x1x8x128xf32>
    tpu.vector_store %arg3[%c0_5, %c0_6, %c0_7, %c0_8], %17 {strides = array<i32>} : memref<1x3x8x128xf32, #tpu.memory_space<vmem>>, vector<1x1x8x128xf32>,
    %cst_9 = arith.constant -1.687360e-01 : f32
    %18 = vector.broadcast %cst_9 : f32 to vector<1x8x128xf32>
    %19 = arith.mulf %18, %2 : vector<1x8x128xf32>
    %cst_10 = arith.constant -3.312640e-01 : f32
    %20 = vector.broadcast %cst_10 : f32 to vector<1x8x128xf32>
    %21 = arith.mulf %20, %4 : vector<1x8x128xf32>
    %22 = arith.addf %19, %21 : vector<1x8x128xf32>
    %cst_11 = arith.constant 5.000000e-01 : f32
    %23 = vector.broadcast %cst_11 : f32 to vector<1x8x128xf32>
    %24 = arith.mulf %23, %6 : vector<1x8x128xf32>
    %25 = arith.addf %22, %24 : vector<1x8x128xf32>
    %cst_12 = arith.constant 0.501960814 : f32
    %26 = vector.broadcast %cst_12 : f32 to vector<1x8x128xf32>
    %27 = arith.addf %25, %26 : vector<1x8x128xf32>
    %c0_13 = arith.constant 0 : index
    %c1 = arith.constant 1 : index
    %c0_14 = arith.constant 0 : index
    %c0_15 = arith.constant 0 : index
    %28 = vector.load %arg3[%c0_13, %c1, %c0_14, %c0_15] : memref<1x3x8x128xf32, #tpu.memory_space<vmem>>, vector<1x1x8x128xf32>
    %29 = vector.shape_cast %28 : vector<1x1x8x128xf32> to vector<1x8x128xf32>
    %30 = vector.shape_cast %27 : vector<1x8x128xf32> to vector<1x1x8x128xf32>
    tpu.vector_store %arg3[%c0_13, %c1, %c0_14, %c0_15], %30 {strides = array<i32>} : memref<1x3x8x128xf32, #tpu.memory_space<vmem>>, vector<1x1x8x128xf32>,
    %cst_16 = arith.constant 5.000000e-01 : f32
    %31 = vector.broadcast %cst_16 : f32 to vector<1x8x128xf32>
    %32 = arith.mulf %31, %2 : vector<1x8x128xf32>
    %cst_17 = arith.constant -4.186880e-01 : f32
    %33 = vector.broadcast %cst_17 : f32 to vector<1x8x128xf32>
    %34 = arith.mulf %33, %4 : vector<1x8x128xf32>
    %35 = arith.addf %32, %34 : vector<1x8x128xf32>
    %cst_18 = arith.constant -8.131200e-02 : f32
    %36 = vector.broadcast %cst_18 : f32 to vector<1x8x128xf32>
    %37 = arith.mulf %36, %6 : vector<1x8x128xf32>
    %38 = arith.addf %35, %37 : vector<1x8x128xf32>
    %cst_19 = arith.constant 0.501960814 : f32
    %39 = vector.broadcast %cst_19 : f32 to vector<1x8x128xf32>
    %40 = arith.addf %38, %39 : vector<1x8x128xf32>
    %c0_20 = arith.constant 0 : index
    %c2 = arith.constant 2 : index
    %c0_21 = arith.constant 0 : index
    %c0_22 = arith.constant 0 : index
    %41 = vector.load %arg3[%c0_20, %c2, %c0_21, %c0_22] : memref<1x3x8x128xf32, #tpu.memory_space<vmem>>, vector<1x1x8x128xf32>
    %42 = vector.shape_cast %41 : vector<1x1x8x128xf32> to vector<1x8x128xf32>
    %43 = vector.shape_cast %40 : vector<1x8x128xf32> to vector<1x1x8x128xf32>
    tpu.vector_store %arg3[%c0_20, %c2, %c0_21, %c0_22], %43 {strides = array<i32>} : memref<1x3x8x128xf32, #tpu.memory_space<vmem>>, vector<1x1x8x128xf32>,
    return
  }
  func.func @transform_0(%arg0: i32, %arg1: i32) -> (i32, i32, i32, i32) {
    %c0_i32 = arith.constant 0 : i32
    %c0_i32_0 = arith.constant 0 : i32
    %c0_i32_1 = arith.constant 0 : i32
    return %arg0, %c0_i32, %arg1, %c0_i32_0 : i32, i32, i32, i32
  }
  func.func @transform_1(%arg0: i32, %arg1: i32) -> (i32, i32, i32, i32) {
    %c0_i32 = arith.constant 0 : i32
    %c0_i32_0 = arith.constant 0 : i32
    %c0_i32_1 = arith.constant 0 : i32
    return %arg0, %c0_i32, %arg1, %c0_i32_0 : i32, i32, i32, i32
  }
}

</mosaic_0001>

<llo_original>
// kernel: tpu_custom_call.1
$region0: #{tpu_custom_call.1}
  #allocation0 [shape = 'u32[]', space=smem, size = 0x4, offset = 0x4, fixed_abs, tag = 'smem constant byte address 0x4 - core index']
  #allocation1 [shape = 'u32[72,128]{1,0:T(1,128)}', space=vmem, size = 0x9000, scoped, tag = 'internal scratch']
  %s0 = inlined_call_operand.hbm [shape: f32[2,3,8,128], index: 0, kind: input, shape index: {}]
  %s1 = inlined_call_operand.hbm [shape: f32[2,3,8,128], index: 1, kind: output, shape index: {}]
  %s2 = sld [smem:[#allocation0]]
  $region41: #{tpu_custom_call.1} parent=0
    _
  %s4 = ssub.s32 1, %s2
  %s5 = scalar_select 0, %s4, %s2
  $region1: #{tpu_custom_call.1} parent=0
    #allocation2 [shape = 'u8[24576]{0}', space=vmem, size = 0x6000, scoped, tag = 'input window, operand 0']
    #allocation3 [shape = 's32[2]{0}', space=sflag, size = 0x8, scoped, tag = 'scoped memory for tpu_custom_call.1']
    #allocation4 [shape = 's32[2]{0}', space=sflag, size = 0x8, scoped, tag = 'scoped memory for tpu_custom_call.1']
    #allocation5 [shape = 'u8[24576]{0}', space=vmem, size = 0x6000, scoped, tag = 'output window, operand 0']
    %6 = vsyncpa [#allocation3], 0
    %s7 = scalar_lea.sflag [#allocation3], 1
    %8 = vsyncpa %s7, 0
    %9 = vsyncpa [#allocation4], 0
    %s10 = scalar_lea.sflag [#allocation4], 1
    %11 = vsyncpa %s10, 0
    loop: start=0, step=1, limit=4
    $region2: #{tpu_custom_call.1} parent=1 // loop_pre_header
      _
    $region3: #{tpu_custom_call.1} parent=1 // loop_header
      %s13 = sphi 0, %s17
      %p14 = scmp.ge.s32.totalorder %s13, 4
      %s20 = sphi 0, %s32
      %s21 = sphi 0, %s28
      %s22 = sphi 0, %s20
      %s23 = sphi 0, %s21
      %s24 = sphi 0, %s22
      %s25 = sphi 0, %s23
      %s37 = sphi 0, %s39
      %s40 = sphi 0, %s37
      %s41 = sphi 0, %s40
      %s57 = sphi 0, %s41
      %s65 = sphi 0, %s67
      %s68 = sphi 0, %s65
      %s69 = sphi 0, %s68
      %s85 = sphi 0, %s69
    $region4: #{tpu_custom_call.1} parent=1 // loop_header_branch
      %16 = sbr.rel (%p14) target = $region8
    $region5: #{tpu_custom_call.1} parent=1 // loop_body
      %s18 = ssub.s32 %s13, 1
      %s19 = ssub.s32 %s13, 2
      %s26 = sadd.s32 1, %s21
      %p27 = scmp.ge.s32.totalorder %s26, 1
      %s28 = scalar_select %p27, 0, %s26
      %s29 = sadd.s32 1, %s20
      %s30 = scalar_select %p27, %s29, %s20
      %p31 = scmp.ge.s32.totalorder %s30, 2
      %s32 = scalar_select %p31, 0, %s30
      %s33 = ssub.s32 %s20, %s32
      %s34 = ssub.s32 %s21, %s28
      %s35 = sor.u32 %s33, %s34
      %p36 = scmp.eq.s32.totalorder %s35, 0
      %s38 = sadd.s32 %s37, 1
      %s39 = scalar_select %p36, %s37, %s38
      %p42 = pneg %p36
      %p43 = scmp.eq.s32.totalorder %s13, 1
      %p44 = por %p42, %p43
      %p45 = scmp.ne.s32.totalorder %s37, %s40
      %p46 = scmp.eq.s32.totalorder %s13, 0
      %p47 = por %p45, %p46
      %p48 = scmp.ne.s32.totalorder %s37, %s40
      %p49 = scmp.eq.s32.totalorder %s18, 1
      %p50 = por %p48, %p49
      %p51 = scmp.ne.s32.totalorder %s40, %s41
      %p52 = scmp.eq.s32.totalorder %s18, 0
      %p53 = por %p51, %p52
      %p54 = scmp.ne.s32.totalorder %s40, %s41
      %p55 = scmp.eq.s32.totalorder %s19, 1
      %p56 = por %p54, %p55
      %p58 = scmp.ne.s32.totalorder %s41, %s57
      %p59 = scmp.eq.s32.totalorder %s19, 0
      %p60 = por %p58, %p59
      %s61 = ssub.s32 %s20, %s32
      %s62 = ssub.s32 %s21, %s28
      %s63 = sor.u32 %s61, %s62
      %p64 = scmp.eq.s32.totalorder %s63, 0
      %s66 = sadd.s32 %s65, 1
      %s67 = scalar_select %p64, %s65, %s66
      %p70 = pneg %p64
      %p71 = scmp.eq.s32.totalorder %s13, 1
      %p72 = por %p70, %p71
      %p73 = scmp.ne.s32.totalorder %s65, %s68
      %p74 = scmp.eq.s32.totalorder %s13, 0
      %p75 = por %p73, %p74
      %p76 = scmp.ne.s32.totalorder %s65, %s68
      %p77 = scmp.eq.s32.totalorder %s18, 1
      %p78 = por %p76, %p77
      %p79 = scmp.ne.s32.totalorder %s68, %s69
      %p80 = scmp.eq.s32.totalorder %s18, 0
      %p81 = por %p79, %p80
      %p82 = scmp.ne.s32.totalorder %s68, %s69
      %p83 = scmp.eq.s32.totalorder %s19, 1
      %p84 = por %p82, %p83
      %p86 = scmp.ne.s32.totalorder %s69, %s85
      %p87 = scmp.eq.s32.totalorder %s19, 0
      %p88 = por %p86, %p87
      %p89 = scmp.le.s32.totalorder 1, %s13
      %p90 = scmp.lt.s32.totalorder %s13, 3
      %p91 = pnand %p89, %p90
      %p92 = pneg %p91
      // Predicated region
      $region9: #{tpu_custom_call.1} parent=5 // pred_check
        _
      $region10: #{tpu_custom_call.1} parent=5 // pred_check_branch
        %94 = sbr.rel (%p91) target = $region12
      $region11: #{tpu_custom_call.1} parent=5 // pred_region
        %s95 = ssub.s32 %s13, 1
      $region12: #{tpu_custom_call.1} parent=5 // pred_fallthru
        _
      %p96 = scmp.lt.s32.totalorder %s13, 2
      // Predicated region
      $region13: #{tpu_custom_call.1} parent=5 // pred_check
        %p97 = pneg %p96
      $region14: #{tpu_custom_call.1} parent=5 // pred_check_branch
        %99 = sbr.rel (%p97) target = $region16
      $region15: #{tpu_custom_call.1} parent=5 // pred_region
        // Predicated region
        $region17: #{tpu_custom_call.1} parent=15 // pred_check
          %p100 = pneg %p47
        $region18: #{tpu_custom_call.1} parent=15 // pred_check_branch
          %102 = sbr.rel (%p100) target = $region20
        $region19: #{tpu_custom_call.1} parent=15 // pred_region
          %s103 = sand.u32 %s37, 1
          %s104 = scalar_lea.sflag [#allocation3], %s103
          %s105 = sand.u32 %s37, 1
          %s106 = smul.addr %s105, 24
          %s107 = scalar_lea.vmem [#allocation2], %s106
          %109 = vsyncadd %s104, 0
          %s110 = smul.addr %s20, 3
          %s111 = sadd.s32 %s21, %s110
          %s112 = smul.addr %s111, 8
          %s113 = scalar_lea.hbm %s0, %s112
          %s114 = sshll.u32 %s113, 4
          %s115 = int_to_ptr.hbm [resolvable:$true] %s114
          %s116 = sshll.u32 %s107, 4
          %s117 = int_to_ptr.vmem [resolvable:$true] %s116
          %122 = dma.hbm_to_vmem [thread:$0]  %s115, 384, %s117, %s104, 128, 128, 8
        $region20: #{tpu_custom_call.1} parent=15 // pred_fallthru
          _
      $region16: #{tpu_custom_call.1} parent=5 // pred_fallthru
        _
      %p123 = scmp.le.s32.totalorder 1, %s13
      %p124 = scmp.lt.s32.totalorder %s13, 3
      %p125 = pnand %p123, %p124
      %p126 = pneg %p125
      // Predicated region
      $region21: #{tpu_custom_call.1} parent=5 // pred_check
        _
      $region22: #{tpu_custom_call.1} parent=5 // pred_check_branch
        %128 = sbr.rel (%p125) target = $region24
      $region23: #{tpu_custom_call.1} parent=5 // pred_region
        %s129 = ssub.s32 %s13, 1
        %s130 = sand.u32 %s40, 1
        %s131 = scalar_lea.sflag [#allocation3], %s130
        %s132 = sand.u32 %s40, 1
        %s133 = smul.addr %s132, 24
        %s134 = scalar_lea.vmem [#allocation2], %s133
        // Predicated region
        $region25: #{tpu_custom_call.1} parent=23 // pred_check
          %p135 = pneg %p53
        $region26: #{tpu_custom_call.1} parent=23 // pred_check_branch
          %137 = sbr.rel (%p135) target = $region28
        $region27: #{tpu_custom_call.1} parent=23 // pred_region
          %139 = dma.done %s131, 384
        $region28: #{tpu_custom_call.1} parent=23 // pred_fallthru
          _
        %s140 = sand.u32 %s40, 1
        %s141 = scalar_lea.sflag [#allocation3], %s140
        %s142 = sand.u32 %s40, 1
        %s143 = smul.addr %s142, 24
        %s144 = scalar_lea.vmem [#allocation2], %s143
        %p145 = pneg %p53
        %p146 = pneg %p50
        %p147 = pneg %p81
        %p148 = pneg %p78
        %s149 = sand.u32 %s68, 1
        %s150 = scalar_lea.sflag [#allocation4], %s149
        %s151 = sand.u32 %s68, 1
        %s152 = smul.addr %s151, 24
        %s153 = scalar_lea.vmem [#allocation5], %s152
        %v154 = vld [vmem:[%s134] sm:$0xff]
        %v155 = vld [vmem:[%s134 + $0x8] sm:$0xff]
        %v156 = vld [vmem:[%s134 + $0x10] sm:$0xff]
        %v157 = vmul.f32 %v154, 0.299
        %v158 = vmul.f32 %v155, 0.587
        %v159 = vadd.f32 %v157, %v158
        %v160 = vmul.f32 %v156, 0.114
        %v161 = vadd.f32 %v159, %v160
        %162 = vst [vmem:[%s153] sm:$0xff] %v161
        %v163 = vmul.f32 %v154, -0.168736
        %v164 = vmul.f32 %v155, -0.331264
        %v165 = vadd.f32 %v163, %v164
        %v166 = vmul.f32 %v156, 0.5
        %v167 = vadd.f32 %v165, %v166
        %v168 = vadd.f32 %v167, 0.5019608
        %s169 = scalar_lea.vmem %s153, 8 [#allocation5]
        %170 = vst [vmem:[%s169] sm:$0xff] %v168
        %v171 = vmul.f32 %v154, 0.5
        %v172 = vmul.f32 %v155, -0.418688
        %v173 = vadd.f32 %v171, %v172
        %v174 = vmul.f32 %v156, -0.081312
        %v175 = vadd.f32 %v173, %v174
        %v176 = vadd.f32 %v175, 0.5019608
        %s177 = scalar_lea.vmem %s153, 16 [#allocation5]
        %178 = vst [vmem:[%s177] sm:$0xff] %v176
        %s179 = sand.u32 %s68, 1
        %s180 = scalar_lea.sflag [#allocation4], %s179
        %s181 = sand.u32 %s68, 1
        %s182 = smul.addr %s181, 24
        %s183 = scalar_lea.vmem [#allocation5], %s182
        // Predicated region
        $region29: #{tpu_custom_call.1} parent=23 // pred_check
          %p184 = pneg %p78
        $region30: #{tpu_custom_call.1} parent=23 // pred_check_branch
          %186 = sbr.rel (%p184) target = $region32
        $region31: #{tpu_custom_call.1} parent=23 // pred_region
          %188 = vsyncadd %s180, 0
          %s189 = smul.addr %s22, 3
          %s190 = sadd.s32 %s23, %s189
          %s191 = smul.addr %s190, 8
          %s192 = scalar_lea.hbm %s1, %s191
          %s193 = sshll.u32 %s183, 4
          %s194 = int_to_ptr.vmem [resolvable:$true] %s193
          %s195 = sshll.u32 %s192, 4
          %s196 = int_to_ptr.hbm [resolvable:$true] %s195
          %201 = dma.vmem_to_hbm [thread:$0]  %s194, 384, %s196, %s180, 128, 128, 8
        $region32: #{tpu_custom_call.1} parent=23 // pred_fallthru
          _
      $region24: #{tpu_custom_call.1} parent=5 // pred_fallthru
        _
      %p202 = scmp.le.s32.totalorder 2, %s13
      // Predicated region
      $region33: #{tpu_custom_call.1} parent=5 // pred_check
        %p203 = pneg %p202
      $region34: #{tpu_custom_call.1} parent=5 // pred_check_branch
        %205 = sbr.rel (%p203) target = $region36
      $region35: #{tpu_custom_call.1} parent=5 // pred_region
        %s206 = ssub.s32 %s13, 2
        // Predicated region
        $region37: #{tpu_custom_call.1} parent=35 // pred_check
          %p207 = pneg %p84
        $region38: #{tpu_custom_call.1} parent=35 // pred_check_branch
          %209 = sbr.rel (%p207) target = $region40
        $region39: #{tpu_custom_call.1} parent=35 // pred_region
          %s210 = sand.u32 %s69, 1
          %s211 = scalar_lea.sflag [#allocation4], %s210
          %s212 = sand.u32 %s69, 1
          %s213 = smul.addr %s212, 24
          %s214 = scalar_lea.vmem [#allocation5], %s213
          %216 = dma.done %s211, 384
        $region40: #{tpu_custom_call.1} parent=35 // pred_fallthru
          _
      $region36: #{tpu_custom_call.1} parent=5 // pred_fallthru
        _
    $region6: #{tpu_custom_call.1} parent=1 // loop_footer
      %s17 = sadd.s32 1, %s13
    $region7: #{tpu_custom_call.1} parent=1 // loop_footer_branch
      %12 = sbr.rel target = $region3
    $region8: #{tpu_custom_call.1} parent=1 // loop_exit
      _
    %217 = vsyncpa [#allocation3], 1
    %s218 = scalar_lea.sflag [#allocation3], 1
    %219 = vsyncpa %s218, 1
    %220 = vsyncpa [#allocation4], 1
    %s221 = scalar_lea.sflag [#allocation4], 1
    %222 = vsyncpa %s221, 1

</llo_original>
